<compile_context>
chip_gen: v7x
topology: tpu7x:2x2x1
jax: 0.10.0
libtpu: 0.0.40
codegen_flags: <defaults>
</compile_context>

<pallas_src>
import math
import functools

import jax
import jax.numpy as jnp
from jax.experimental import pallas as pl
from jax.experimental.pallas import tpu as pltpu


_MURMUR_C1 = 0x85EBCA6B
_MURMUR_C2 = 0xC2B2AE35
_GOLDEN = 0x9E3779B1

# Double-buffered (x-in + out + pe) block budget: multi-MB DMA steps (>=85% of
# HBM roofline per the tiling sweep), conservative for v7x's 64 MiB physical
# VMEM (v5e/v6e have 128 MiB).
_IO_VMEM_BUDGET = 16 * 1024 * 1024
# Scoped VMEM limit: above the 16/32 MiB defaults, below v7x's 64 MiB physical,
# leaves headroom for the dropout-mask temporaries.
_VMEM_LIMIT_BYTES = 48 * 1024 * 1024


def _hash_u32(x, seed):
    """Portable murmur3-style mix of (counter, seed) -> uniform uint32 bits.

    Fallback PRNG for non-TPU backends / interpret mode only; the TPU path
    uses the hardware PRNG.
    """
    x = x ^ (seed * jnp.uint32(_GOLDEN))
    x = x ^ (x >> 16)
    x = x * jnp.uint32(_MURMUR_C1)
    x = x ^ (x >> 13)
    x = x * jnp.uint32(_MURMUR_C2)
    x = x ^ (x >> 16)
    x = x ^ seed
    x = x ^ (x >> 15)
    x = x * jnp.uint32(_MURMUR_C1)
    x = x ^ (x >> 13)
    return x


def _pos_encoding_kernel(seed_ref, x_ref, pe_ref, o_ref, *,
                         dropout_p: float, use_hw_prng: bool):
    # x_ref : (TS, B, E) VMEM block of token embeddings
    # pe_ref: (TS, 1, E) VMEM block of the positional table
    # o_ref : (TS, B, E) VMEM output block
    x = x_ref[...]
    pe = pe_ref[...].astype(x.dtype)
    # Broadcast the (TS, 1, E) table over the batch (sublane) axis: a plain
    # broadcast-add on the VPU, no concatenation / extra VMEM copies.
    y = x + pe

    if dropout_p > 0.0:
        if use_hw_prng:
            # Hardware PRNG: one raw-bits draw per vreg on the dedicated unit,
            # far cheaper than a VALU hash chain for this HBM-bound kernel.
            pltpu.prng_seed(seed_ref[0], pl.program_id(0))
            bits = pltpu.prng_random_bits(y.shape)
            if bits.dtype != jnp.uint32:
                bits = pltpu.bitcast(bits, jnp.uint32)
        else:
            # Portable counter-based hash (interpret / CPU fallback): mask
            # depends only on (seed, global element index).
            ts, b, e = y.shape
            pid = pl.program_id(0).astype(jnp.uint32)
            i = jax.lax.broadcasted_iota(jnp.int32, y.shape, 0).astype(jnp.uint32)
            j = jax.lax.broadcasted_iota(jnp.int32, y.shape, 1).astype(jnp.uint32)
            k = jax.lax.broadcasted_iota(jnp.int32, y.shape, 2).astype(jnp.uint32)
            gidx = ((pid * jnp.uint32(ts) + i) * jnp.uint32(b) + j) * jnp.uint32(e) + k
            bits = _hash_u32(gidx, seed_ref[0].astype(jnp.uint32))

        # Keep with prob (1 - p): compare raw bits against a static threshold,
        # then a single select-multiply with the 1/(1-p) scale folded in.
        thresh = jnp.uint32(min(int(round(dropout_p * (2.0 ** 32))), 2 ** 32 - 1))
        keep = bits >= thresh
        scale = jnp.asarray(1.0 / (1.0 - dropout_p), dtype=y.dtype)
        y = y * jnp.where(keep, scale, jnp.zeros((), dtype=y.dtype))

    o_ref[...] = y.astype(o_ref.dtype)


def make_pos_embedding(emb_size: int, maxlen: int = 5000) -> jnp.ndarray:
    """Deterministic sin/cos table, same construction as the PyTorch __init__."""
    den = jnp.exp(-jnp.arange(0, emb_size, 2, dtype=jnp.float32) * math.log(10000.0) / emb_size)
    pos = jnp.arange(0, maxlen, dtype=jnp.float32).reshape(maxlen, 1)
    pe = jnp.zeros((maxlen, emb_size), dtype=jnp.float32)
    pe = pe.at[:, 0::2].set(jnp.sin(pos * den))
    pe = pe.at[:, 1::2].set(jnp.cos(pos * den))
    return pe[:, None, :]  # (maxlen, 1, emb_size)


def _choose_seq_tile(S: int, B: int, E: int, x_itemsize: int, pe_itemsize: int) -> int:
    """Largest sequence tile whose pipelined VMEM footprint fits the budget."""
    bp = ((B + 7) // 8) * 8           # sublane padding of the batch dim
    ep = ((E + 127) // 128) * 128     # lane padding of the embedding dim
    # Per sequence row: double-buffered x block + out block + pe block.
    per_row = 2 * (2 * x_itemsize * bp * ep) + 2 * pe_itemsize * 8 * ep
    max_rows = max(1, _IO_VMEM_BUDGET // max(per_row, 1))
    ts = min(S, max_rows)
    if ts >= 8:
        ts = (ts // 8) * 8            # keep it a nice multiple of 8
    return max(1, ts)


def positional_encoding(
    token_embedding: jnp.ndarray,
    pos_embedding: jnp.ndarray,
    *,
    dropout_p: float = 0.1,
    seed: int = 0,
    use_hw_prng: bool | None = None,
) -> jnp.ndarray:
    """token_embedding: (S, B, E); pos_embedding: (maxlen, 1, E)."""
    S, B, E = token_embedding.shape
    pe = pos_embedding[:S]                            # (S, 1, E) glue slice in plain JAX
    if use_hw_prng is None:
        use_hw_prng = jax.default_backend() == "tpu"

    TS = _choose_seq_tile(S, B, E, token_embedding.dtype.itemsize, pe.dtype.itemsize)
    grid = (pl.cdiv(S, TS),)

    seed_arr = jnp.asarray([seed], dtype=jnp.int32)
    kernel = functools.partial(
        _pos_encoding_kernel,
        dropout_p=float(dropout_p),
        use_hw_prng=bool(use_hw_prng),
    )

    return pl.pallas_call(
        kernel,
        out_shape=jax.ShapeDtypeStruct((S, B, E), token_embedding.dtype),
        grid_spec=pl.GridSpec(
            grid=grid,
            in_specs=[
                pl.BlockSpec(memory_space=pltpu.MemorySpace.SMEM),     # seed scalar
                pl.BlockSpec((TS, B, E), lambda i: (i, 0, 0)),         # token embeddings
                pl.BlockSpec((TS, 1, E), lambda i: (i, 0, 0)),         # positional table
            ],
            out_specs=pl.BlockSpec((TS, B, E), lambda i: (i, 0, 0)),
        ),
        compiler_params=pltpu.CompilerParams(
            dimension_semantics=("parallel",),       # independent blocks -> both v7x TCs
            vmem_limit_bytes=_VMEM_LIMIT_BYTES,
        ),
    )(seed_arr, token_embedding, pe)


if __name__ == "__main__":
    key = jax.random.PRNGKey(0)
    S, B, E = 8, 2, 32  # seq=8, batch=2, emb_size=32
    x = jax.random.normal(key, (S, B, E), dtype=jnp.float32)

    pos_emb = make_pos_embedding(E, maxlen=5000)

    # Eval mode (dropout disabled): exact reference check out == x + pe.
    out_eval = positional_encoding(x, pos_emb, dropout_p=0.0)
    jax.block_until_ready(out_eval)
    ref = x + pos_emb[:S]
    assert jnp.allclose(out_eval, ref, atol=1e-6), "mismatch vs reference add"

    # Train mode (stochastic inverted dropout).
    p = 0.1
    out_train = positional_encoding(x, pos_emb, dropout_p=p, seed=42)
    jax.block_until_ready(out_train)
    # Every surviving element must equal ref / (1 - p); dropped elements are 0.
    kept = out_train != 0.0
    assert jnp.allclose(
        jnp.where(kept, out_train, 0.0),
        jnp.where(kept, ref / (1.0 - p), 0.0),
        atol=1e-5,
    ), "dropout scale mismatch"

    print("KERNEL_OK")
</pallas_src>

<mosaic_0001>
module attributes {stable_mosaic.version = 11 : i64} {
  func.func @_pos_encoding_kernel(%arg0: i32, %arg1: memref<1xi32, #tpu.memory_space<smem>>, %arg2: memref<8x2x32xf32, #tpu.memory_space<vmem>>, %arg3: memref<8x1x32xf32, #tpu.memory_space<vmem>>, %arg4: memref<8x2x32xf32, #tpu.memory_space<vmem>>) attributes {dimension_semantics = [#tpu.dimension_semantics<parallel>], iteration_bounds = array<i64: 1>, scalar_prefetch = 0 : i64, scratch_operands = 0 : i64, tpu.core_type = #tpu.core_type<tc>, window_params = [{transform_indices = @transform_0, window_bounds = array<i64: 1>}, {transform_indices = @transform_1, window_bounds = array<i64: 8, 2, 32>}, {transform_indices = @transform_2, window_bounds = array<i64: 8, 1, 32>}, {transform_indices = @transform_3, window_bounds = array<i64: 8, 2, 32>}]} {
    %c0 = arith.constant 0 : index
    %c0_0 = arith.constant 0 : index
    %c0_1 = arith.constant 0 : index
    %0 = vector.load %arg2[%c0, %c0_0, %c0_1] : memref<8x2x32xf32, #tpu.memory_space<vmem>>, vector<8x2x32xf32>
    %c0_2 = arith.constant 0 : index
    %c0_3 = arith.constant 0 : index
    %c0_4 = arith.constant 0 : index
    %1 = vector.load %arg3[%c0_2, %c0_3, %c0_4] : memref<8x1x32xf32, #tpu.memory_space<vmem>>, vector<8x1x32xf32>
    %2 = vector.broadcast %1 : vector<8x1x32xf32> to vector<8x2x32xf32>
    %3 = arith.addf %0, %2 : vector<8x2x32xf32>
    %c0_5 = arith.constant 0 : index
    %c0_6 = arith.constant 0 : index
    %c0_7 = arith.constant 0 : index
    %4 = vector.load %arg4[%c0_5, %c0_6, %c0_7] : memref<8x2x32xf32, #tpu.memory_space<vmem>>, vector<8x2x32xf32>
    tpu.vector_store %arg4[%c0_5, %c0_6, %c0_7], %3 {strides = array<i32>} : memref<8x2x32xf32, #tpu.memory_space<vmem>>, vector<8x2x32xf32>,
    return
  }
  func.func @transform_0(%arg0: i32) -> i32 {
    %c0_i32 = arith.constant 0 : i32
    %c0_i32_0 = arith.constant 0 : i32
    return %c0_i32 : i32
  }
  func.func @transform_1(%arg0: i32) -> (i32, i32, i32) {
    %c0_i32 = arith.constant 0 : i32
    %c0_i32_0 = arith.constant 0 : i32
    %c0_i32_1 = arith.constant 0 : i32
    return %arg0, %c0_i32, %c0_i32_0 : i32, i32, i32
  }
  func.func @transform_2(%arg0: i32) -> (i32, i32, i32) {
    %c0_i32 = arith.constant 0 : i32
    %c0_i32_0 = arith.constant 0 : i32
    %c0_i32_1 = arith.constant 0 : i32
    return %arg0, %c0_i32, %c0_i32_0 : i32, i32, i32
  }
  func.func @transform_3(%arg0: i32) -> (i32, i32, i32) {
    %c0_i32 = arith.constant 0 : i32
    %c0_i32_0 = arith.constant 0 : i32
    %c0_i32_1 = arith.constant 0 : i32
    return %arg0, %c0_i32, %c0_i32_0 : i32, i32, i32
  }
}

</mosaic_0001>

<llo_original>
// kernel: tpu_custom_call.1
$region0: #{tpu_custom_call.1}
  #allocation0 [shape = 'u32[]', space=smem, size = 0x4, offset = 0x4, fixed_abs, tag = 'smem constant byte address 0x4 - core index']
  #allocation1 [shape = 'u32[144,128]{1,0:T(1,128)}', space=vmem, size = 0x12000, scoped, tag = 'internal scratch']
  #allocation2 [shape = 's32[1]{0:T(128)S(6)}', space=smem, size = 0x200, scoped, tag = 'scoped memory for tpu_custom_call.1']
  %s0 = inlined_call_operand.<no memory space> [shape: s32[1], index: 0, kind: input, shape index: {}]
  %s1 = inlined_call_operand.hbm [shape: f32[8,2,32], index: 1, kind: input, shape index: {}]
  %s2 = inlined_call_operand.hbm [shape: f32[8,1,32], index: 2, kind: input, shape index: {}]
  %s3 = inlined_call_operand.hbm [shape: f32[8,2,32], index: 3, kind: output, shape index: {}]
  %s4 = sld [smem:[#allocation0]]
  $region30: #{tpu_custom_call.1} parent=0
    _
  %s6 = ssub.s32 1, %s4
  %s7 = scalar_select 0, %s6, %s4
  %8 = sst [smem:[#allocation2]] %s0
  $region1: #{tpu_custom_call.1} parent=0
    #allocation3 [shape = 'u8[8192]{0}', space=vmem, size = 0x2000, scoped, tag = 'input window, operand 1, single buffered']
    #allocation4 [shape = 's32[1]{0}', space=sflag, size = 0x4, scoped, tag = 'scoped memory for tpu_custom_call.1']
    #allocation5 [shape = 's32[1]{0}', space=sflag, size = 0x4, scoped, tag = 'scoped memory for tpu_custom_call.1']
    #allocation6 [shape = 'u8[4096]{0}', space=vmem, size = 0x1000, scoped, tag = 'input window, operand 2, single buffered']
    #allocation7 [shape = 's32[1]{0}', space=sflag, size = 0x4, scoped, tag = 'scoped memory for tpu_custom_call.1']
    #allocation8 [shape = 'u8[8192]{0}', space=vmem, size = 0x2000, scoped, tag = 'output window, operand 0, single buffered']
    %9 = vsyncpa [#allocation4], 0
    %10 = vsyncpa [#allocation7], 0
    %11 = vsyncpa [#allocation5], 0
    // Predicated region
    $region2: #{tpu_custom_call.1} parent=1 // pred_check
      _
    $region3: #{tpu_custom_call.1} parent=1 // pred_check_branch
      %13 = sbr.rel (0) target = $region5
    $region4: #{tpu_custom_call.1} parent=1 // pred_region
      _
    $region5: #{tpu_custom_call.1} parent=1 // pred_fallthru
      _
    // Predicated region
    $region6: #{tpu_custom_call.1} parent=1 // pred_check
      _
    $region7: #{tpu_custom_call.1} parent=1 // pred_check_branch
      %15 = sbr.rel (0) target = $region9
    $region8: #{tpu_custom_call.1} parent=1 // pred_region
      %s17 = ssub.s32 256, 256
      %18 = vsyncadd [#allocation4], %s17
      %s19 = sshll.u32 [#allocation3], 4
      %s20 = int_to_ptr.vmem [resolvable:$true] %s19
      %25 = dma.hbm_to_vmem [thread:$0]  %s1, 256, %s20, [#allocation4], 32, 32, 2
    $region9: #{tpu_custom_call.1} parent=1 // pred_fallthru
      _
    // Predicated region
    $region10: #{tpu_custom_call.1} parent=1 // pred_check
      _
    $region11: #{tpu_custom_call.1} parent=1 // pred_check_branch
      %27 = sbr.rel (0) target = $region13
    $region12: #{tpu_custom_call.1} parent=1 // pred_region
      %s29 = ssub.s32 128, 128
      %30 = vsyncadd [#allocation7], %s29
      %s31 = sshll.u32 [#allocation6], 4
      %s32 = int_to_ptr.vmem [resolvable:$true] %s31
      %37 = dma.hbm_to_vmem [thread:$0]  %s2, 128, %s32, [#allocation7], 16, 16, 1
    $region13: #{tpu_custom_call.1} parent=1 // pred_fallthru
      _
    // Predicated region
    $region14: #{tpu_custom_call.1} parent=1 // pred_check
      _
    $region15: #{tpu_custom_call.1} parent=1 // pred_check_branch
      %39 = sbr.rel (0) target = $region17
    $region16: #{tpu_custom_call.1} parent=1 // pred_region
      %40 = dma.done [#allocation4], 256
    $region17: #{tpu_custom_call.1} parent=1 // pred_fallthru
      _
    // Predicated region
    $region18: #{tpu_custom_call.1} parent=1 // pred_check
      _
    $region19: #{tpu_custom_call.1} parent=1 // pred_check_branch
      %42 = sbr.rel (0) target = $region21
    $region20: #{tpu_custom_call.1} parent=1 // pred_region
      %43 = dma.done [#allocation7], 128
    $region21: #{tpu_custom_call.1} parent=1 // pred_fallthru
      _
    %v44 = vld [vmem:[#allocation3] sm:$0x3]
    %v45 = vld [vmem:[#allocation3 + $0x2] sm:$0x3]
    %v46 = vld [vmem:[#allocation3 + $0x4] sm:$0x3]
    %v47 = vld [vmem:[#allocation3 + $0x6] sm:$0x3]
    %v48 = vld [vmem:[#allocation3 + $0x8] sm:$0x3]
    %v49 = vld [vmem:[#allocation3 + $0xa] sm:$0x3]
    %v50 = vld [vmem:[#allocation3 + $0xc] sm:$0x3]
    %v51 = vld [vmem:[#allocation3 + $0xe] sm:$0x3]
    %v52 = vld [vmem:[#allocation6] sm:$0x1]
    %v53 = vld [vmem:[#allocation6 + $0x1] sm:$0x1]
    %v54 = vld [vmem:[#allocation6 + $0x2] sm:$0x1]
    %v55 = vld [vmem:[#allocation6 + $0x3] sm:$0x1]
    %v56 = vld [vmem:[#allocation6 + $0x4] sm:$0x1]
    %v57 = vld [vmem:[#allocation6 + $0x5] sm:$0x1]
    %v58 = vld [vmem:[#allocation6 + $0x6] sm:$0x1]
    %v59 = vld [vmem:[#allocation6 + $0x7] sm:$0x1]
    %v68 = vlaneseq
    %v69 = vshrl.u32 %v68, 7
    %v70 = vsub.s32 0, %v69
    %v71 = vrot.slane %v52, %v70
    %v72 = vlaneseq
    %v73 = vshrl.u32 %v72, 7
    %v74 = vsub.s32 0, %v73
    %v75 = vrot.slane %v53, %v74
    %v76 = vlaneseq
    %v77 = vshrl.u32 %v76, 7
    %v78 = vsub.s32 0, %v77
    %v79 = vrot.slane %v54, %v78
    %v80 = vlaneseq
    %v81 = vshrl.u32 %v80, 7
    %v82 = vsub.s32 0, %v81
    %v83 = vrot.slane %v55, %v82
    %v84 = vlaneseq
    %v85 = vshrl.u32 %v84, 7
    %v86 = vsub.s32 0, %v85
    %v87 = vrot.slane %v56, %v86
    %v88 = vlaneseq
    %v89 = vshrl.u32 %v88, 7
    %v90 = vsub.s32 0, %v89
    %v91 = vrot.slane %v57, %v90
    %v92 = vlaneseq
    %v93 = vshrl.u32 %v92, 7
    %v94 = vsub.s32 0, %v93
    %v95 = vrot.slane %v58, %v94
    %v96 = vlaneseq
    %v97 = vshrl.u32 %v96, 7
    %v98 = vsub.s32 0, %v97
    %v99 = vrot.slane %v59, %v98
    %v108 = vadd.f32 %v44, %v71
    %v109 = vadd.f32 %v45, %v75
    %v110 = vadd.f32 %v46, %v79
    %v111 = vadd.f32 %v47, %v83
    %v112 = vadd.f32 %v48, %v87
    %v113 = vadd.f32 %v49, %v91
    %v114 = vadd.f32 %v50, %v95
    %v115 = vadd.f32 %v51, %v99
    %vm116 = vcmask 254976
    %117 = vst.msk [vmem:[#allocation8] sm:$0x3] %vm116, %v108
    %118 = vst.msk [vmem:[#allocation8 + $0x2] sm:$0x3] %vm116, %v109
    %119 = vst.msk [vmem:[#allocation8 + $0x4] sm:$0x3] %vm116, %v110
    %120 = vst.msk [vmem:[#allocation8 + $0x6] sm:$0x3] %vm116, %v111
    %121 = vst.msk [vmem:[#allocation8 + $0x8] sm:$0x3] %vm116, %v112
    %122 = vst.msk [vmem:[#allocation8 + $0xa] sm:$0x3] %vm116, %v113
    %123 = vst.msk [vmem:[#allocation8 + $0xc] sm:$0x3] %vm116, %v114
    %124 = vst.msk [vmem:[#allocation8 + $0xe] sm:$0x3] %vm116, %v115
    // Predicated region
    $region22: #{tpu_custom_call.1} parent=1 // pred_check
      _
    $region23: #{tpu_custom_call.1} parent=1 // pred_check_branch
      %126 = sbr.rel (0) target = $region25
    $region24: #{tpu_custom_call.1} parent=1 // pred_region
      %s128 = ssub.s32 256, 256
      %129 = vsyncadd [#allocation5], %s128
      %s130 = sshll.u32 [#allocation8], 4
      %s131 = int_to_ptr.vmem [resolvable:$true] %s130
      %136 = dma.vmem_to_hbm [thread:$0]  %s131, 256, %s3, [#allocation5], 32, 32, 2
    $region25: #{tpu_custom_call.1} parent=1 // pred_fallthru
      _
    // Predicated region
    $region26: #{tpu_custom_call.1} parent=1 // pred_check
      _
    $region27: #{tpu_custom_call.1} parent=1 // pred_check_branch
      %138 = sbr.rel (0) target = $region29
    $region28: #{tpu_custom_call.1} parent=1 // pred_region
      %139 = dma.done [#allocation5], 256
    $region29: #{tpu_custom_call.1} parent=1 // pred_fallthru
      _
    %140 = vsyncpa [#allocation4], 1
    %141 = vsyncpa [#allocation7], 1
    %142 = vsyncpa [#allocation5], 1

</llo_original>
